<compile_context>
chip_gen: v5e
topology: v5e:2x2
jax: 0.10.0
libtpu: 0.0.40
codegen_flags: <defaults>
</compile_context>

<pallas_src>
import jax
import jax.numpy as jnp
from jax import lax
from jax.experimental import pallas as pl
from jax.experimental.pallas import tpu as pltpu

# ---- small, module-consistent config -------------------------------------------------
EMB_DIM = 32            # embedding_dim   (module default 300)
FILTERS = 16            # filters         (module default 50)
KERNEL_SIZES = (3, 4, 5)
MAX_K = max(KERNEL_SIZES)
OUT_SIZE = 32           # output_size == feature_dim (module default 100)
VOCAB = 64
NUM_WORDS = 16
NUM_UTT = 4
BATCH = 4
LANE = 128              # TPU lane width: each shift-group / the FC output is padded to it
TN = 8                  # utterance-rows per grid step -> grid of 2 parallel steps


def textcnn_kernel(ids_ref, mask_ref, table_ref, wconv_ref, bias_ref, fcw_ref, out_ref):
    TNW = TN * NUM_WORDS

    # ---- embedding gather inside the kernel (one-hot @ table on the MXU) --------------
    ids = ids_ref[...]                                                  # (TNW, 1) int32
    onehot = (ids == lax.broadcasted_iota(jnp.int32, (TNW, VOCAB), 1)).astype(jnp.float32)
    emb = jnp.dot(onehot, table_ref[...], preferred_element_type=jnp.float32)   # (TNW, D)

    # ---- all conv taps in one lane-dense matmul ----------------------------------------
    y = jnp.dot(emb.astype(jnp.bfloat16), wconv_ref[...],
                preferred_element_type=jnp.float32)                     # (TNW, MAX_K*LANE)

    # shift-and-accumulate: shift-group s holds tap s of every kernel size (zero-padded).
    # pltpu.roll wraps rows only into the tail time positions that are masked below.
    acc = y[:, 0:LANE]
    for s in range(1, MAX_K):
        acc = acc + pltpu.roll(y[:, s * LANE:(s + 1) * LANE], shift=TNW - s, axis=0)

    acc = jnp.maximum(acc + bias_ref[0:1, :], 0.0)                      # bias + ReLU
    acc = acc.reshape(TN, NUM_WORDS, LANE)

    # mask invalid tail positions (t >= W-K+1) per kernel-size lane group, then max-pool.
    t_idx = lax.broadcasted_iota(jnp.int32, (TN, NUM_WORDS, LANE), 1)
    lane = lax.broadcasted_iota(jnp.int32, (TN, NUM_WORDS, LANE), 2)
    valid_len = jnp.where(lane < FILTERS, NUM_WORDS - 2,
                          jnp.where(lane < 2 * FILTERS, NUM_WORDS - 3, NUM_WORDS - 4))
    acc = jnp.where(t_idx < valid_len, acc, 0.0)    # ReLU output >= 0, zeros never win the max
    pooled = jnp.max(acc, axis=1)                   # (TN, LANE): lanes [0,3F) = concat(p3,p4,p5)

    # ---- FC + ReLU + utterance mask (dropout is identity in eval mode) -----------------
    feats = jnp.dot(pooled.astype(jnp.bfloat16), fcw_ref[...],
                    preferred_element_type=jnp.float32)                 # (TN, LANE)
    feats = jnp.maximum(feats + bias_ref[1:2, :], 0.0)
    out_ref[...] = feats * mask_ref[...]                                # (TN, LANE) * (TN, 1)


def pack_params(params):
    """Pack all module parameters into 4 kernel arrays (MXU operands in bf16)."""
    wconv = jnp.zeros((EMB_DIM, MAX_K * LANE), jnp.float32)
    for j, K in enumerate(KERNEL_SIZES):
        w = params["w%d" % K]                                    # (K, D, F)
        for s in range(K):
            col = s * LANE + j * FILTERS
            wconv = wconv.at[:, col:col + FILTERS].set(w[s])
    bias = jnp.zeros((2, LANE), jnp.float32)
    for j, K in enumerate(KERNEL_SIZES):
        bias = bias.at[0, j * FILTERS:(j + 1) * FILTERS].set(params["b%d" % K][0])
    bias = bias.at[1, 0:OUT_SIZE].set(params["fc_b"][0])
    fcw = jnp.zeros((LANE, LANE), jnp.float32)
    fcw = fcw.at[0:3 * FILTERS, 0:OUT_SIZE].set(params["fc_w"])
    return (params["embedding"].astype(jnp.float32),
            wconv.astype(jnp.bfloat16), bias, fcw.astype(jnp.bfloat16))


def cnn_feature_extractor(x, umask, packed):
    """x: (num_utt, batch, num_words) int tokens; umask: (batch, num_utt) float mask."""
    table, wconv, bias, fcw = packed
    num_utt, batch, num_words = x.shape
    N = num_utt * batch

    ids = x.reshape(N * num_words, 1).astype(jnp.int32)
    # torch: mask = umask.unsqueeze(-1).transpose(0,1) -> (num_utt, batch, 1)
    mask = jnp.transpose(umask.astype(jnp.float32), (1, 0)).reshape(N, 1)

    grid = (N // TN,)   # 2 parallel steps: keeps both v7x TensorCores busy
    out = pl.pallas_call(
        textcnn_kernel,
        out_shape=jax.ShapeDtypeStruct((N, LANE), jnp.float32),
        grid_spec=pltpu.PrefetchScalarGridSpec(
            num_scalar_prefetch=0,
            grid=grid,
            in_specs=[
                pl.BlockSpec((TN * num_words, 1), lambda i: (i, 0)),      # token ids
                pl.BlockSpec((TN, 1), lambda i: (i, 0)),                  # utterance mask
                pl.BlockSpec((VOCAB, EMB_DIM), lambda i: (0, 0)),         # embedding table
                pl.BlockSpec((EMB_DIM, MAX_K * LANE), lambda i: (0, 0)),  # packed conv weights
                pl.BlockSpec((2, LANE), lambda i: (0, 0)),                # packed conv + fc bias
                pl.BlockSpec((LANE, LANE), lambda i: (0, 0)),             # padded FC weights
            ],
            out_specs=pl.BlockSpec((TN, LANE), lambda i: (i, 0)),
        ),
        compiler_params=pltpu.CompilerParams(dimension_semantics=("parallel",)),
    )(ids, mask, table, wconv, bias, fcw)
    # output is stored lane-dense (128 lanes); strip the padding here.
    return out[:, :OUT_SIZE].reshape(num_utt, batch, OUT_SIZE)


def reference(x, umask, params):
    """Pure-JAX f32 reference mirroring the PyTorch forward (eval mode)."""
    num_utt, batch, num_words = x.shape
    N = num_utt * batch
    emb = jnp.take(params["embedding"], x.reshape(N, num_words).astype(jnp.int32), axis=0)
    pooled = []
    for K in KERNEL_SIZES:
        w, b = params["w%d" % K], params["b%d" % K]
        T = num_words - K + 1
        acc = jnp.zeros((N, T, FILTERS), jnp.float32)
        for k in range(K):
            acc = acc + jnp.einsum("ntd,df->ntf", emb[:, k:k + T, :], w[k])
        acc = jax.nn.relu(acc + b[None])
        pooled.append(jnp.max(acc, axis=1))
    concated = jnp.concatenate(pooled, axis=1)
    feats = jax.nn.relu(concated @ params["fc_w"] + params["fc_b"])
    feats = feats.reshape(num_utt, batch, OUT_SIZE)
    mask = jnp.transpose(umask.astype(jnp.float32), (1, 0))[:, :, None]
    return feats * mask


def init_params(key):
    ks = jax.random.split(key, 10)
    emb_table = 0.1 * jax.random.normal(ks[0], (VOCAB, EMB_DIM), jnp.float32)
    emb_table = emb_table.at[0].set(0.0)  # padding_idx=0 row is zero
    params = {
        "embedding": emb_table,
        # conv weights stored as (K, in_channels=EMB_DIM, out_channels=FILTERS)
        "w3": 0.1 * jax.random.normal(ks[1], (3, EMB_DIM, FILTERS), jnp.float32),
        "b3": 0.1 * jax.random.normal(ks[2], (1, FILTERS), jnp.float32),
        "w4": 0.1 * jax.random.normal(ks[3], (4, EMB_DIM, FILTERS), jnp.float32),
        "b4": 0.1 * jax.random.normal(ks[4], (1, FILTERS), jnp.float32),
        "w5": 0.1 * jax.random.normal(ks[5], (5, EMB_DIM, FILTERS), jnp.float32),
        "b5": 0.1 * jax.random.normal(ks[6], (1, FILTERS), jnp.float32),
        "fc_w": 0.1 * jax.random.normal(ks[7], (3 * FILTERS, OUT_SIZE), jnp.float32),
        "fc_b": 0.1 * jax.random.normal(ks[8], (1, OUT_SIZE), jnp.float32),
    }
    return params


if __name__ == "__main__":
    key = jax.random.PRNGKey(0)
    kp, kx, km = jax.random.split(key, 3)
    params = init_params(kp)
    packed = pack_params(params)

    # x: (num_utt, batch, num_words) token ids; umask: (batch, num_utt) 0/1 mask
    x = jax.random.randint(kx, (NUM_UTT, BATCH, NUM_WORDS), 0, VOCAB, dtype=jnp.int32)
    umask = (jax.random.uniform(km, (BATCH, NUM_UTT)) > 0.3).astype(jnp.float32)

    out = cnn_feature_extractor(x, umask, packed)
    out = jax.block_until_ready(out)

    ref = reference(x, umask, params)
    assert out.shape == (NUM_UTT, BATCH, OUT_SIZE)
    # bf16 MXU operands -> loosened tolerance vs the f32 reference
    assert jnp.allclose(out, ref, rtol=2e-2, atol=2e-2), "mismatch vs JAX reference"
    print("KERNEL_OK")
</pallas_src>

<mosaic_0001>
module attributes {stable_mosaic.version = 11 : i64} {
  func.func @textcnn_kernel(%arg0: i32, %arg1: memref<128x1xi32, #tpu.memory_space<vmem>>, %arg2: memref<8x1xf32, #tpu.memory_space<vmem>>, %arg3: memref<64x32xf32, #tpu.memory_space<vmem>>, %arg4: memref<32x640xbf16, #tpu.memory_space<vmem>>, %arg5: memref<2x128xf32, #tpu.memory_space<vmem>>, %arg6: memref<128x128xbf16, #tpu.memory_space<vmem>>, %arg7: memref<8x128xf32, #tpu.memory_space<vmem>>) attributes {dimension_semantics = [#tpu.dimension_semantics<parallel>], iteration_bounds = array<i64: 2>, scalar_prefetch = 0 : i64, scratch_operands = 0 : i64, tpu.core_type = #tpu.core_type<tc>, window_params = [{transform_indices = @transform_0, window_bounds = array<i64: 128, 1>}, {transform_indices = @transform_1, window_bounds = array<i64: 8, 1>}, {pipeline_mode = #tpu.pipeline_mode<synchronous>, transform_indices = @transform_2, window_bounds = array<i64: 64, 32>}, {pipeline_mode = #tpu.pipeline_mode<synchronous>, transform_indices = @transform_3, window_bounds = array<i64: 32, 640>}, {pipeline_mode = #tpu.pipeline_mode<synchronous>, transform_indices = @transform_4, window_bounds = array<i64: 2, 128>}, {pipeline_mode = #tpu.pipeline_mode<synchronous>, transform_indices = @transform_5, window_bounds = array<i64: 128, 128>}, {transform_indices = @transform_6, window_bounds = array<i64: 8, 128>}]} {
    %c0 = arith.constant 0 : index
    %c0_0 = arith.constant 0 : index
    %0 = vector.load %arg1[%c0, %c0_0] : memref<128x1xi32, #tpu.memory_space<vmem>>, vector<128x1xi32>
    %1 = tpu.iota {dimensions = array<i32: 1>} : vector<128x64xi32>
    %2 = vector.broadcast %0 : vector<128x1xi32> to vector<128x64xi32>
    %3 = arith.cmpi eq, %2, %1 : vector<128x64xi32>
    %4 = arith.extui %3 : vector<128x64xi1> to vector<128x64xi32>
    %5 = arith.sitofp %4 : vector<128x64xi32> to vector<128x64xf32>
    %c0_1 = arith.constant 0 : index
    %c0_2 = arith.constant 0 : index
    %6 = vector.load %arg3[%c0_1, %c0_2] : memref<64x32xf32, #tpu.memory_space<vmem>>, vector<64x32xf32>
    %cst = arith.constant dense<0.000000e+00> : vector<128x32xf32>
    %7 = tpu.matmul %5, %6, %cst {dimension_numbers = #tpu.dot_dimension_numbers<[1], [0], [0], [1], [0, 0, 1, 1], [], []>} : vector<128x64xf32>, vector<64x32xf32>, vector<128x32xf32> -> vector<128x32xf32>
    %8 = arith.truncf %7 : vector<128x32xf32> to vector<128x32xbf16>
    %c0_3 = arith.constant 0 : index
    %c0_4 = arith.constant 0 : index
    %9 = vector.load %arg4[%c0_3, %c0_4] : memref<32x640xbf16, #tpu.memory_space<vmem>>, vector<32x640xbf16>
    %cst_5 = arith.constant dense<0.000000e+00> : vector<128x640xf32>
    %10 = tpu.matmul %8, %9, %cst_5 {dimension_numbers = #tpu.dot_dimension_numbers<[1], [0], [0], [1], [0, 0, 1, 1], [], []>} : vector<128x32xbf16>, vector<32x640xbf16>, vector<128x640xf32> -> vector<128x640xf32>
    %11 = vector.extract_strided_slice %10 {offsets = [0, 0], sizes = [128, 128], strides = [1, 1]} : vector<128x640xf32> to vector<128x128xf32>
    %12 = vector.extract_strided_slice %10 {offsets = [0, 128], sizes = [128, 128], strides = [1, 1]} : vector<128x640xf32> to vector<128x128xf32>
    %c127_i32 = arith.constant 127 : i32
    %13 = tpu.dynamic_rotate %12 by %c127_i32 dim 0 : vector<128x128xf32>, i32 -> vector<128x128xf32>
    %14 = arith.addf %11, %13 : vector<128x128xf32>
    %15 = vector.extract_strided_slice %10 {offsets = [0, 256], sizes = [128, 128], strides = [1, 1]} : vector<128x640xf32> to vector<128x128xf32>
    %c126_i32 = arith.constant 126 : i32
    %16 = tpu.dynamic_rotate %15 by %c126_i32 dim 0 : vector<128x128xf32>, i32 -> vector<128x128xf32>
    %17 = arith.addf %14, %16 : vector<128x128xf32>
    %18 = vector.extract_strided_slice %10 {offsets = [0, 384], sizes = [128, 128], strides = [1, 1]} : vector<128x640xf32> to vector<128x128xf32>
    %c125_i32 = arith.constant 125 : i32
    %19 = tpu.dynamic_rotate %18 by %c125_i32 dim 0 : vector<128x128xf32>, i32 -> vector<128x128xf32>
    %20 = arith.addf %17, %19 : vector<128x128xf32>
    %21 = vector.extract_strided_slice %10 {offsets = [0, 512], sizes = [128, 128], strides = [1, 1]} : vector<128x640xf32> to vector<128x128xf32>
    %c124_i32 = arith.constant 124 : i32
    %22 = tpu.dynamic_rotate %21 by %c124_i32 dim 0 : vector<128x128xf32>, i32 -> vector<128x128xf32>
    %23 = arith.addf %20, %22 : vector<128x128xf32>
    %c0_6 = arith.constant 0 : index
    %c0_7 = arith.constant 0 : index
    %24 = vector.load %arg5[%c0_6, %c0_7] : memref<2x128xf32, #tpu.memory_space<vmem>>, vector<1x128xf32>
    %25 = vector.broadcast %24 : vector<1x128xf32> to vector<128x128xf32>
    %26 = arith.addf %23, %25 : vector<128x128xf32>
    %cst_8 = arith.constant 0.000000e+00 : f32
    %27 = vector.broadcast %cst_8 : f32 to vector<128x128xf32>
    %28 = arith.maximumf %26, %27 : vector<128x128xf32>
    %29 = vector.shape_cast %28 : vector<128x128xf32> to vector<8x16x128xf32>
    %30 = tpu.iota {dimensions = array<i32: 1>} : vector<8x16x128xi32>
    %31 = tpu.iota {dimensions = array<i32: 2>} : vector<8x16x128xi32>
    %c16_i32 = arith.constant 16 : i32
    %32 = vector.broadcast %c16_i32 : i32 to vector<8x16x128xi32>
    %33 = arith.cmpi slt, %31, %32 : vector<8x16x128xi32>
    %c32_i32 = arith.constant 32 : i32
    %34 = vector.broadcast %c32_i32 : i32 to vector<8x16x128xi32>
    %35 = arith.cmpi slt, %31, %34 : vector<8x16x128xi32>
    %c13_i32 = arith.constant 13 : i32
    %c12_i32 = arith.constant 12 : i32
    %36 = vector.broadcast %c13_i32 : i32 to vector<8x16x128xi32>
    %37 = vector.broadcast %c12_i32 : i32 to vector<8x16x128xi32>
    %38 = arith.select %35, %36, %37 : vector<8x16x128xi1>, vector<8x16x128xi32>
    %c14_i32 = arith.constant 14 : i32
    %39 = vector.broadcast %c14_i32 : i32 to vector<8x16x128xi32>
    %40 = arith.select %33, %39, %38 : vector<8x16x128xi1>, vector<8x16x128xi32>
    %41 = arith.cmpi slt, %30, %40 : vector<8x16x128xi32>
    %cst_9 = arith.constant 0.000000e+00 : f32
    %42 = vector.broadcast %cst_9 : f32 to vector<8x16x128xf32>
    %43 = arith.select %41, %29, %42 : vector<8x16x128xi1>, vector<8x16x128xf32>
    %cst_10 = arith.constant dense<0xFF800000> : vector<8x128xf32>
    %44 = vector.multi_reduction <maximumf>, %43, %cst_10 [1] : vector<8x16x128xf32> to vector<8x128xf32>
    %45 = arith.truncf %44 : vector<8x128xf32> to vector<8x128xbf16>
    %c0_11 = arith.constant 0 : index
    %c0_12 = arith.constant 0 : index
    %46 = vector.load %arg6[%c0_11, %c0_12] : memref<128x128xbf16, #tpu.memory_space<vmem>>, vector<128x128xbf16>
    %cst_13 = arith.constant dense<0.000000e+00> : vector<8x128xf32>
    %47 = tpu.matmul %45, %46, %cst_13 {dimension_numbers = #tpu.dot_dimension_numbers<[1], [0], [0], [1], [0, 0, 1, 1], [], []>} : vector<8x128xbf16>, vector<128x128xbf16>, vector<8x128xf32> -> vector<8x128xf32>
    %c1 = arith.constant 1 : index
    %c0_14 = arith.constant 0 : index
    %48 = vector.load %arg5[%c1, %c0_14] : memref<2x128xf32, #tpu.memory_space<vmem>>, vector<1x128xf32>
    %49 = vector.broadcast %48 : vector<1x128xf32> to vector<8x128xf32>
    %50 = arith.addf %47, %49 : vector<8x128xf32>
    %cst_15 = arith.constant 0.000000e+00 : f32
    %51 = vector.broadcast %cst_15 : f32 to vector<8x128xf32>
    %52 = arith.maximumf %50, %51 : vector<8x128xf32>
    %c0_16 = arith.constant 0 : index
    %c0_17 = arith.constant 0 : index
    %53 = vector.load %arg2[%c0_16, %c0_17] : memref<8x1xf32, #tpu.memory_space<vmem>>, vector<8x1xf32>
    %54 = vector.broadcast %53 : vector<8x1xf32> to vector<8x128xf32>
    %55 = arith.mulf %52, %54 : vector<8x128xf32>
    %c0_18 = arith.constant 0 : index
    %c0_19 = arith.constant 0 : index
    %56 = vector.load %arg7[%c0_18, %c0_19] : memref<8x128xf32, #tpu.memory_space<vmem>>, vector<8x128xf32>
    tpu.vector_store %arg7[%c0_18, %c0_19], %55 {strides = array<i32>} : memref<8x128xf32, #tpu.memory_space<vmem>>, vector<8x128xf32>,
    return
  }
  func.func @transform_0(%arg0: i32) -> (i32, i32) {
    %c0_i32 = arith.constant 0 : i32
    %c0_i32_0 = arith.constant 0 : i32
    return %arg0, %c0_i32 : i32, i32
  }
  func.func @transform_1(%arg0: i32) -> (i32, i32) {
    %c0_i32 = arith.constant 0 : i32
    %c0_i32_0 = arith.constant 0 : i32
    return %arg0, %c0_i32 : i32, i32
  }
  func.func @transform_2(%arg0: i32) -> (i32, i32) {
    %c0_i32 = arith.constant 0 : i32
    %c0_i32_0 = arith.constant 0 : i32
    %c0_i32_1 = arith.constant 0 : i32
    return %c0_i32, %c0_i32_0 : i32, i32
  }
  func.func @transform_3(%arg0: i32) -> (i32, i32) {
    %c0_i32 = arith.constant 0 : i32
    %c0_i32_0 = arith.constant 0 : i32
    %c0_i32_1 = arith.constant 0 : i32
    return %c0_i32, %c0_i32_0 : i32, i32
  }
  func.func @transform_4(%arg0: i32) -> (i32, i32) {
    %c0_i32 = arith.constant 0 : i32
    %c0_i32_0 = arith.constant 0 : i32
    %c0_i32_1 = arith.constant 0 : i32
    return %c0_i32, %c0_i32_0 : i32, i32
  }
  func.func @transform_5(%arg0: i32) -> (i32, i32) {
    %c0_i32 = arith.constant 0 : i32
    %c0_i32_0 = arith.constant 0 : i32
    %c0_i32_1 = arith.constant 0 : i32
    return %c0_i32, %c0_i32_0 : i32, i32
  }
  func.func @transform_6(%arg0: i32) -> (i32, i32) {
    %c0_i32 = arith.constant 0 : i32
    %c0_i32_0 = arith.constant 0 : i32
    return %arg0, %c0_i32 : i32, i32
  }
}

</mosaic_0001>

<llo_original>
// kernel: tpu_custom_call.1
$region0: #{tpu_custom_call.1}
  #allocation0 [shape = 'u32[]', space=smem, size = 0x4, offset = 0x4, fixed_abs, tag = 'smem constant byte address 0x4 - core index']
  #allocation1 [shape = 'u32[72,128]{1,0:T(1,128)}', space=vmem, size = 0x9000, scoped, tag = 'internal scratch']
  %s0 = inlined_call_operand.vmem [shape: s32[256,1], index: 0, kind: input, shape index: {}]
  %s1 = inlined_call_operand.vmem [shape: f32[16,1], index: 1, kind: input, shape index: {}]
  %s2 = inlined_call_operand.vmem [shape: f32[64,32], index: 2, kind: input, shape index: {}]
  %s3 = inlined_call_operand.vmem [shape: bf16[32,640], index: 3, kind: input, shape index: {}]
  %s4 = inlined_call_operand.vmem [shape: f32[2,128], index: 4, kind: input, shape index: {}]
  %s5 = inlined_call_operand.vmem [shape: bf16[128,128], index: 5, kind: input, shape index: {}]
  %s6 = inlined_call_operand.hbm [shape: f32[16,128], index: 6, kind: output, shape index: {}]
  %s7 = sld [smem:[#allocation0]]
  $region57: #{tpu_custom_call.1} parent=0
    _
  %s9 = ssub.s32 1, %s7
  %s10 = scalar_select 0, %s9, %s7
  $region1: #{tpu_custom_call.1} parent=0
    #allocation2 [shape = 'u8[8192]{0}', space=vmem, size = 0x2000, scoped, tag = 'output window, operand 0']
    #allocation3 [shape = 's32[2]{0}', space=sflag, size = 0x8, scoped, tag = 'scoped memory for tpu_custom_call.1']
    %11 = vsyncpa [#allocation3], 0
    %s12 = scalar_lea.sflag [#allocation3], 1
    %13 = vsyncpa %s12, 0
    loop: start=0, step=1, limit=4
    $region2: #{tpu_custom_call.1} parent=1 // loop_pre_header
      _
    $region3: #{tpu_custom_call.1} parent=1 // loop_header
      %s15 = sphi 0, %s19
      %p16 = scmp.ge.s32.totalorder %s15, 4
      %s25 = sphi 0, %s27
      %s28 = sphi 0, %s25
      %s29 = sphi 0, %s28
      %s45 = sphi 0, %s29
      %s51 = sphi 0, %s53
      %s54 = sphi 0, %s51
      %s55 = sphi 0, %s54
      %s71 = sphi 0, %s55
      %s75 = sphi 0, %s75
      %s77 = sphi 0, %s75
      %s78 = sphi 0, %s77
      %s92 = sphi 0, %s78
      %s96 = sphi 0, %s96
      %s98 = sphi 0, %s96
      %s99 = sphi 0, %s98
      %s113 = sphi 0, %s99
      %s117 = sphi 0, %s117
      %s119 = sphi 0, %s117
      %s120 = sphi 0, %s119
      %s134 = sphi 0, %s120
      %s138 = sphi 0, %s138
      %s140 = sphi 0, %s138
      %s141 = sphi 0, %s140
      %s155 = sphi 0, %s141
      %s161 = sphi 0, %s163
      %s164 = sphi 0, %s161
      %s165 = sphi 0, %s164
      %s181 = sphi 0, %s165
    $region4: #{tpu_custom_call.1} parent=1 // loop_header_branch
      %18 = sbr.rel (%p16) target = $region8
    $region5: #{tpu_custom_call.1} parent=1 // loop_body
      %s20 = ssub.s32 %s15, 1
      %s21 = ssub.s32 %s15, 2
      %s22 = sadd.s32 %s15, 1
      %s23 = ssub.s32 %s15, %s22
      %p24 = scmp.eq.s32.totalorder %s23, 0
      %s26 = sadd.s32 %s25, 1
      %s27 = scalar_select %p24, %s25, %s26
      %p30 = pneg %p24
      %p31 = scmp.eq.s32.totalorder %s15, 1
      %p32 = por %p30, %p31
      %p33 = scmp.ne.s32.totalorder %s25, %s28
      %p34 = scmp.eq.s32.totalorder %s15, 0
      %p35 = por %p33, %p34
      %p36 = scmp.ne.s32.totalorder %s25, %s28
      %p37 = scmp.eq.s32.totalorder %s20, 1
      %p38 = por %p36, %p37
      %p39 = scmp.ne.s32.totalorder %s28, %s29
      %p40 = scmp.eq.s32.totalorder %s20, 0
      %p41 = por %p39, %p40
      %p42 = scmp.ne.s32.totalorder %s28, %s29
      %p43 = scmp.eq.s32.totalorder %s21, 1
      %p44 = por %p42, %p43
      %p46 = scmp.ne.s32.totalorder %s29, %s45
      %p47 = scmp.eq.s32.totalorder %s21, 0
      %p48 = por %p46, %p47
      %s49 = ssub.s32 %s15, %s22
      %p50 = scmp.eq.s32.totalorder %s49, 0
      %s52 = sadd.s32 %s51, 1
      %s53 = scalar_select %p50, %s51, %s52
      %p56 = pneg %p50
      %p57 = scmp.eq.s32.totalorder %s15, 1
      %p58 = por %p56, %p57
      %p59 = scmp.ne.s32.totalorder %s51, %s54
      %p60 = scmp.eq.s32.totalorder %s15, 0
      %p61 = por %p59, %p60
      %p62 = scmp.ne.s32.totalorder %s51, %s54
      %p63 = scmp.eq.s32.totalorder %s20, 1
      %p64 = por %p62, %p63
      %p65 = scmp.ne.s32.totalorder %s54, %s55
      %p66 = scmp.eq.s32.totalorder %s20, 0
      %p67 = por %p65, %p66
      %p68 = scmp.ne.s32.totalorder %s54, %s55
      %p69 = scmp.eq.s32.totalorder %s21, 1
      %p70 = por %p68, %p69
      %p72 = scmp.ne.s32.totalorder %s55, %s71
      %p73 = scmp.eq.s32.totalorder %s21, 0
      %p74 = por %p72, %p73
      %s76 = sadd.s32 %s75, 1
      %p79 = scmp.eq.s32.totalorder %s15, 1
      %p80 = scmp.ne.s32.totalorder %s75, %s77
      %p81 = scmp.eq.s32.totalorder %s15, 0
      %p82 = por %p80, %p81
      %p83 = scmp.ne.s32.totalorder %s75, %s77
      %p84 = scmp.eq.s32.totalorder %s20, 1
      %p85 = por %p83, %p84
      %p86 = scmp.ne.s32.totalorder %s77, %s78
      %p87 = scmp.eq.s32.totalorder %s20, 0
      %p88 = por %p86, %p87
      %p89 = scmp.ne.s32.totalorder %s77, %s78
      %p90 = scmp.eq.s32.totalorder %s21, 1
      %p91 = por %p89, %p90
      %p93 = scmp.ne.s32.totalorder %s78, %s92
      %p94 = scmp.eq.s32.totalorder %s21, 0
      %p95 = por %p93, %p94
      %s97 = sadd.s32 %s96, 1
      %p100 = scmp.eq.s32.totalorder %s15, 1
      %p101 = scmp.ne.s32.totalorder %s96, %s98
      %p102 = scmp.eq.s32.totalorder %s15, 0
      %p103 = por %p101, %p102
      %p104 = scmp.ne.s32.totalorder %s96, %s98
      %p105 = scmp.eq.s32.totalorder %s20, 1
      %p106 = por %p104, %p105
      %p107 = scmp.ne.s32.totalorder %s98, %s99
      %p108 = scmp.eq.s32.totalorder %s20, 0
      %p109 = por %p107, %p108
      %p110 = scmp.ne.s32.totalorder %s98, %s99
      %p111 = scmp.eq.s32.totalorder %s21, 1
      %p112 = por %p110, %p111
      %p114 = scmp.ne.s32.totalorder %s99, %s113
      %p115 = scmp.eq.s32.totalorder %s21, 0
      %p116 = por %p114, %p115
      %s118 = sadd.s32 %s117, 1
      %p121 = scmp.eq.s32.totalorder %s15, 1
      %p122 = scmp.ne.s32.totalorder %s117, %s119
      %p123 = scmp.eq.s32.totalorder %s15, 0
      %p124 = por %p122, %p123
      %p125 = scmp.ne.s32.totalorder %s117, %s119
      %p126 = scmp.eq.s32.totalorder %s20, 1
      %p127 = por %p125, %p126
      %p128 = scmp.ne.s32.totalorder %s119, %s120
      %p129 = scmp.eq.s32.totalorder %s20, 0
      %p130 = por %p128, %p129
      %p131 = scmp.ne.s32.totalorder %s119, %s120
      %p132 = scmp.eq.s32.totalorder %s21, 1
      %p133 = por %p131, %p132
      %p135 = scmp.ne.s32.totalorder %s120, %s134
      %p136 = scmp.eq.s32.totalorder %s21, 0
      %p137 = por %p135, %p136
      %s139 = sadd.s32 %s138, 1
      %p142 = scmp.eq.s32.totalorder %s15, 1
      %p143 = scmp.ne.s32.totalorder %s138, %s140
      %p144 = scmp.eq.s32.totalorder %s15, 0
      %p145 = por %p143, %p144
      %p146 = scmp.ne.s32.totalorder %s138, %s140
      %p147 = scmp.eq.s32.totalorder %s20, 1
      %p148 = por %p146, %p147
      %p149 = scmp.ne.s32.totalorder %s140, %s141
      %p150 = scmp.eq.s32.totalorder %s20, 0
      %p151 = por %p149, %p150
      %p152 = scmp.ne.s32.totalorder %s140, %s141
      %p153 = scmp.eq.s32.totalorder %s21, 1
      %p154 = por %p152, %p153
      %p156 = scmp.ne.s32.totalorder %s141, %s155
      %p157 = scmp.eq.s32.totalorder %s21, 0
      %p158 = por %p156, %p157
      %s159 = ssub.s32 %s15, %s22
      %p160 = scmp.eq.s32.totalorder %s159, 0
      %s162 = sadd.s32 %s161, 1
      %s163 = scalar_select %p160, %s161, %s162
      %p166 = pneg %p160
      %p167 = scmp.eq.s32.totalorder %s15, 1
      %p168 = por %p166, %p167
      %p169 = scmp.ne.s32.totalorder %s161, %s164
      %p170 = scmp.eq.s32.totalorder %s15, 0
      %p171 = por %p169, %p170
      %p172 = scmp.ne.s32.totalorder %s161, %s164
      %p173 = scmp.eq.s32.totalorder %s20, 1
      %p174 = por %p172, %p173
      %p175 = scmp.ne.s32.totalorder %s164, %s165
      %p176 = scmp.eq.s32.totalorder %s20, 0
      %p177 = por %p175, %p176
      %p178 = scmp.ne.s32.totalorder %s164, %s165
      %p179 = scmp.eq.s32.totalorder %s21, 1
      %p180 = por %p178, %p179
      %p182 = scmp.ne.s32.totalorder %s165, %s181
      %p183 = scmp.eq.s32.totalorder %s21, 0
      %p184 = por %p182, %p183
      %p185 = scmp.le.s32.totalorder 1, %s15
      %p186 = scmp.lt.s32.totalorder %s15, 3
      %p187 = pnand %p185, %p186
      %p188 = pneg %p187
      // Predicated region
      $region9: #{tpu_custom_call.1} parent=5 // pred_check
        _
      $region10: #{tpu_custom_call.1} parent=5 // pred_check_branch
        %190 = sbr.rel (%p187) target = $region12
      $region11: #{tpu_custom_call.1} parent=5 // pred_region
        %s191 = ssub.s32 %s15, 1
        // Predicated region
        $region13: #{tpu_custom_call.1} parent=11 // pred_check
          %p192 = pneg %p88
        $region14: #{tpu_custom_call.1} parent=11 // pred_check_branch
          %194 = sbr.rel (%p192) target = $region16
        $region15: #{tpu_custom_call.1} parent=11 // pred_region
          _
        $region16: #{tpu_custom_call.1} parent=11 // pred_fallthru
          _
        // Predicated region
        $region17: #{tpu_custom_call.1} parent=11 // pred_check
          %p195 = pneg %p109
        $region18: #{tpu_custom_call.1} parent=11 // pred_check_branch
          %197 = sbr.rel (%p195) target = $region20
        $region19: #{tpu_custom_call.1} parent=11 // pred_region
          _
        $region20: #{tpu_custom_call.1} parent=11 // pred_fallthru
          _
        // Predicated region
        $region21: #{tpu_custom_call.1} parent=11 // pred_check
          %p198 = pneg %p130
        $region22: #{tpu_custom_call.1} parent=11 // pred_check_branch
          %200 = sbr.rel (%p198) target = $region24
        $region23: #{tpu_custom_call.1} parent=11 // pred_region
          _
        $region24: #{tpu_custom_call.1} parent=11 // pred_fallthru
          _
        // Predicated region
        $region25: #{tpu_custom_call.1} parent=11 // pred_check
          %p201 = pneg %p151
        $region26: #{tpu_custom_call.1} parent=11 // pred_check_branch
          %203 = sbr.rel (%p201) target = $region28
        $region27: #{tpu_custom_call.1} parent=11 // pred_region
          _
        $region28: #{tpu_custom_call.1} parent=11 // pred_fallthru
          _
      $region12: #{tpu_custom_call.1} parent=5 // pred_fallthru
        _
      %p204 = scmp.lt.s32.totalorder %s15, 2
      // Predicated region
      $region29: #{tpu_custom_call.1} parent=5 // pred_check
        %p205 = pneg %p204
      $region30: #{tpu_custom_call.1} parent=5 // pred_check_branch
        %207 = sbr.rel (%p205) target = $region32
      $region31: #{tpu_custom_call.1} parent=5 // pred_region
        // Predicated region
        $region33: #{tpu_custom_call.1} parent=31 // pred_check
          %p208 = pneg %p35
        $region34: #{tpu_custom_call.1} parent=31 // pred_check_branch
          %210 = sbr.rel (%p208) target = $region36
        $region35: #{tpu_custom_call.1} parent=31 // pred_region
          %s211 = smul.u32 16, %s15
          %p212 = scmp.lt.s32.totalorder %s211, 31
          %s213 = scalar_select %p212, %s211, 31
          %s214 = smul.addr %s213, 8
          %s215 = scalar_lea.vmem %s0, %s214
          %s216 = smul.u32 16, %s15
        $region36: #{tpu_custom_call.1} parent=31 // pred_fallthru
          _
        // Predicated region
        $region37: #{tpu_custom_call.1} parent=31 // pred_check
          %p217 = pneg %p61
        $region38: #{tpu_custom_call.1} parent=31 // pred_check_branch
          %219 = sbr.rel (%p217) target = $region40
        $region39: #{tpu_custom_call.1} parent=31 // pred_region
          %p220 = scmp.lt.s32.totalorder %s15, 1
          %s221 = scalar_select %p220, %s15, 1
          %s222 = smul.addr %s221, 8
          %s223 = scalar_lea.vmem %s1, %s222
        $region40: #{tpu_custom_call.1} parent=31 // pred_fallthru
          _
      $region32: #{tpu_custom_call.1} parent=5 // pred_fallthru
        _
      %p224 = scmp.le.s32.totalorder 1, %s15
      %p225 = scmp.lt.s32.totalorder %s15, 3
      %p226 = pnand %p224, %p225
      %p227 = pneg %p226
      // Predicated region
      $region41: #{tpu_custom_call.1} parent=5 // pred_check
        _
      $region42: #{tpu_custom_call.1} parent=5 // pred_check_branch
        %229 = sbr.rel (%p226) target = $region44
      $region43: #{tpu_custom_call.1} parent=5 // pred_region
        %s230 = ssub.s32 %s15, 1
        %s231 = smul.u32 16, %s20
        %p232 = scmp.lt.s32.totalorder %s231, 31
        %s233 = scalar_select %p232, %s231, 31
        %s234 = smul.addr %s233, 8
        %s235 = scalar_lea.vmem %s0, %s234
        %p236 = pneg %p41
        %p237 = pneg %p38
        %p238 = scmp.lt.s32.totalorder %s20, 1
        %s239 = scalar_select %p238, %s20, 1
        %s240 = smul.addr %s239, 8
        %s241 = scalar_lea.vmem %s1, %s240
        %p242 = pneg %p67
        %p243 = pneg %p64
        %p244 = pneg %p88
        %p245 = pneg %p85
        %p246 = pneg %p109
        %p247 = pneg %p106
        %p248 = pneg %p130
        %p249 = pneg %p127
        %p250 = pneg %p151
        %p251 = pneg %p148
        %p252 = pneg %p177
        %p253 = pneg %p174
        %s254 = sand.u32 %s164, 1
        %s255 = scalar_lea.sflag [#allocation3], %s254
        %s256 = sand.u32 %s164, 1
        %s257 = smul.addr %s256, 8
        %s258 = scalar_lea.vmem [#allocation2], %s257
        %s259 = smul.u32 16, %s20
        %p260 = scmp.lt.s32.totalorder %s259, 31
        %s261 = scalar_select %p260, %s259, 31
        %s262 = smul.addr %s261, 8
        %s263 = scalar_lea.vmem %s0, %s262
        %s264 = smul.u32 16, %s20
        %p265 = scmp.lt.s32.totalorder %s20, 1
        %s266 = scalar_select %p265, %s20, 1
        %s267 = smul.addr %s266, 8
        %s268 = scalar_lea.vmem %s1, %s267
        %v270 = vld [vmem:[%s263] sm:$0xff]
        %v271 = vld [vmem:[%s263 + $0x8] sm:$0xff]
        %v272 = vld [vmem:[%s263 + $0x10] sm:$0xff]
        %v273 = vld [vmem:[%s263 + $0x18] sm:$0xff]
        %v274 = vld [vmem:[%s263 + $0x20] sm:$0xff]
        %v275 = vld [vmem:[%s263 + $0x28] sm:$0xff]
        %v276 = vld [vmem:[%s263 + $0x30] sm:$0xff]
        %v277 = vld [vmem:[%s263 + $0x38] sm:$0xff]
        %v278 = vld [vmem:[%s263 + $0x40] sm:$0xff]
        %v279 = vld [vmem:[%s263 + $0x48] sm:$0xff]
        %v280 = vld [vmem:[%s263 + $0x50] sm:$0xff]
        %v281 = vld [vmem:[%s263 + $0x58] sm:$0xff]
        %v282 = vld [vmem:[%s263 + $0x60] sm:$0xff]
        %v283 = vld [vmem:[%s263 + $0x68] sm:$0xff]
        %v284 = vld [vmem:[%s263 + $0x70] sm:$0xff]
        %v285 = vld [vmem:[%s263 + $0x78] sm:$0xff]
        %v286 = vlaneseq
        %v287 = vand.u32 %v286, 127
        %288 = vset.pattern.permute.xlu0 0
        %289 = vperm.xlu0 %288, %v270
        %v290 = vpop.permute.xlu0 %289
        %291 = vset.pattern.permute.xlu0 0
        %292 = vperm.xlu0 %291, %v271
        %v293 = vpop.permute.xlu0 %292
        %294 = vset.pattern.permute.xlu0 0
        %295 = vperm.xlu0 %294, %v272
        %v296 = vpop.permute.xlu0 %295
        %297 = vset.pattern.permute.xlu0 0
        %298 = vperm.xlu0 %297, %v273
        %v299 = vpop.permute.xlu0 %298
        %300 = vset.pattern.permute.xlu0 0
        %301 = vperm.xlu0 %300, %v274
        %v302 = vpop.permute.xlu0 %301
        %303 = vset.pattern.permute.xlu0 0
        %304 = vperm.xlu0 %303, %v275
        %v305 = vpop.permute.xlu0 %304
        %306 = vset.pattern.permute.xlu0 0
        %307 = vperm.xlu0 %306, %v276
        %v308 = vpop.permute.xlu0 %307
        %309 = vset.pattern.permute.xlu0 0
        %310 = vperm.xlu0 %309, %v277
        %v311 = vpop.permute.xlu0 %310
        %312 = vset.pattern.permute.xlu0 0
        %313 = vperm.xlu0 %312, %v278
        %v314 = vpop.permute.xlu0 %313
        %315 = vset.pattern.permute.xlu0 0
        %316 = vperm.xlu0 %315, %v279
        %v317 = vpop.permute.xlu0 %316
        %318 = vset.pattern.permute.xlu0 0
        %319 = vperm.xlu0 %318, %v280
        %v320 = vpop.permute.xlu0 %319
        %321 = vset.pattern.permute.xlu0 0
        %322 = vperm.xlu0 %321, %v281
        %v323 = vpop.permute.xlu0 %322
        %324 = vset.pattern.permute.xlu0 0
        %325 = vperm.xlu0 %324, %v282
        %v326 = vpop.permute.xlu0 %325
        %327 = vset.pattern.permute.xlu0 0
        %328 = vperm.xlu0 %327, %v283
        %v329 = vpop.permute.xlu0 %328
        %330 = vset.pattern.permute.xlu0 0
        %331 = vperm.xlu0 %330, %v284
        %v332 = vpop.permute.xlu0 %331
        %333 = vset.pattern.permute.xlu0 0
        %334 = vperm.xlu0 %333, %v285
        %v335 = vpop.permute.xlu0 %334
        %vm336 = vcmp.eq.s32.totalorder %v290, %v287
        %vm337 = vcmp.eq.s32.totalorder %v293, %v287
        %vm338 = vcmp.eq.s32.totalorder %v296, %v287
        %vm339 = vcmp.eq.s32.totalorder %v299, %v287
        %vm340 = vcmp.eq.s32.totalorder %v302, %v287
        %vm341 = vcmp.eq.s32.totalorder %v305, %v287
        %vm342 = vcmp.eq.s32.totalorder %v308, %v287
        %vm343 = vcmp.eq.s32.totalorder %v311, %v287
        %vm344 = vcmp.eq.s32.totalorder %v314, %v287
        %vm345 = vcmp.eq.s32.totalorder %v317, %v287
        %vm346 = vcmp.eq.s32.totalorder %v320, %v287
        %vm347 = vcmp.eq.s32.totalorder %v323, %v287
        %vm348 = vcmp.eq.s32.totalorder %v326, %v287
        %vm349 = vcmp.eq.s32.totalorder %v329, %v287
        %vm350 = vcmp.eq.s32.totalorder %v332, %v287
        %vm351 = vcmp.eq.s32.totalorder %v335, %v287
        %v352 = vsel %vm336, 1, 0
        %v353 = vsel %vm337, 1, 0
        %v354 = vsel %vm338, 1, 0
        %v355 = vsel %vm339, 1, 0
        %v356 = vsel %vm340, 1, 0
        %v357 = vsel %vm341, 1, 0
        %v358 = vsel %vm342, 1, 0
        %v359 = vsel %vm343, 1, 0
        %v360 = vsel %vm344, 1, 0
        %v361 = vsel %vm345, 1, 0
        %v362 = vsel %vm346, 1, 0
        %v363 = vsel %vm347, 1, 0
        %v364 = vsel %vm348, 1, 0
        %v365 = vsel %vm349, 1, 0
        %v366 = vsel %vm350, 1, 0
        %v367 = vsel %vm351, 1, 0
        %v368 = vcvt.s32.f32 %v352
        %v369 = vcvt.s32.f32 %v353
        %v370 = vcvt.s32.f32 %v354
        %v371 = vcvt.s32.f32 %v355
        %v372 = vcvt.s32.f32 %v356
        %v373 = vcvt.s32.f32 %v357
        %v374 = vcvt.s32.f32 %v358
        %v375 = vcvt.s32.f32 %v359
        %v376 = vcvt.s32.f32 %v360
        %v377 = vcvt.s32.f32 %v361
        %v378 = vcvt.s32.f32 %v362
        %v379 = vcvt.s32.f32 %v363
        %v380 = vcvt.s32.f32 %v364
        %v381 = vcvt.s32.f32 %v365
        %v382 = vcvt.s32.f32 %v366
        %v383 = vcvt.s32.f32 %v367
        %v384 = vld [vmem:[%s2] sm:$0xff]
        %v385 = vld [vmem:[%s2 + $0x8] sm:$0xff]
        %v386 = vld [vmem:[%s2 + $0x10] sm:$0xff]
        %v387 = vld [vmem:[%s2 + $0x18] sm:$0xff]
        %v388 = vld [vmem:[%s2 + $0x20] sm:$0xff]
        %v389 = vld [vmem:[%s2 + $0x28] sm:$0xff]
        %v390 = vld [vmem:[%s2 + $0x30] sm:$0xff]
        %v391 = vld [vmem:[%s2 + $0x38] sm:$0xff]
        %vm392 = vcmask 523264
        %v394 = vsel %vm392, %v368, 0
        %v397 = vsel %vm392, %v369, 0
        %v400 = vsel %vm392, %v370, 0
        %v403 = vsel %vm392, %v371, 0
        %v406 = vsel %vm392, %v372, 0
        %v409 = vsel %vm392, %v373, 0
        %v412 = vsel %vm392, %v374, 0
        %v415 = vsel %vm392, %v375, 0
        %v418 = vsel %vm392, %v376, 0
        %v421 = vsel %vm392, %v377, 0
        %v424 = vsel %vm392, %v378, 0
        %v427 = vsel %vm392, %v379, 0
        %v430 = vsel %vm392, %v380, 0
        %v433 = vsel %vm392, %v381, 0
        %v436 = vsel %vm392, %v382, 0
        %v439 = vsel %vm392, %v383, 0
        %441 = vmatpush.msra.mxu0 0.0
        %442 = vmatpush.msra.mxu0 0.0
        %443 = vmatpush.msra.mxu0 0.0
        %444 = vmatpush.msra.mxu0 0.0
        %445 = vmatpush.msra.mxu0 0.0
        %446 = vmatpush.msra.mxu0 0.0
        %447 = vmatpush.msra.mxu0 0.0
        %448 = vmatpush.msra.mxu0 0.0
        %449 = vmatpush.msra.mxu0 %v391
        %450 = vmatpush.msra.mxu0 %v390
        %451 = vmatpush.msra.mxu0 %v389
        %452 = vmatpush.msra.mxu0 %v388
        %453 = vmatpush.msra.mxu0 %v387
        %454 = vmatpush.msra.mxu0 %v386
        %455 = vmatpush.msra.mxu0 %v385
        %456 = vmatpush.msra.mxu0 %v384
        %457 = vmatmul.f32.gmra.mxu0 %v394
        %v458 = vpop.f32.mrf.mxu0
        %v459 = vadd.f32 0.0, %v458
        %460 = vmatmul.f32.gmra.mxu0 %v397
        %v461 = vpop.f32.mrf.mxu0
        %v462 = vadd.f32 0.0, %v461
        %463 = vmatmul.f32.gmra.mxu0 %v400
        %v464 = vpop.f32.mrf.mxu0
        %v465 = vadd.f32 0.0, %v464
        %466 = vmatmul.f32.gmra.mxu0 %v403
        %v467 = vpop.f32.mrf.mxu0
        %v468 = vadd.f32 0.0, %v467
        %469 = vmatmul.f32.gmra.mxu0 %v406
        %v470 = vpop.f32.mrf.mxu0
        %v471 = vadd.f32 0.0, %v470
        %472 = vmatmul.f32.gmra.mxu0 %v409
        %v473 = vpop.f32.mrf.mxu0
        %v474 = vadd.f32 0.0, %v473
        %475 = vmatmul.f32.gmra.mxu0 %v412
        %v476 = vpop.f32.mrf.mxu0
        %v477 = vadd.f32 0.0, %v476
        %478 = vmatmul.f32.gmra.mxu0 %v415
        %v479 = vpop.f32.mrf.mxu0
        %v480 = vadd.f32 0.0, %v479
        %481 = vmatmul.f32.gmra.mxu0 %v418
        %v482 = vpop.f32.mrf.mxu0
        %v483 = vadd.f32 0.0, %v482
        %484 = vmatmul.f32.gmra.mxu0 %v421
        %v485 = vpop.f32.mrf.mxu0
        %v486 = vadd.f32 0.0, %v485
        %487 = vmatmul.f32.gmra.mxu0 %v424
        %v488 = vpop.f32.mrf.mxu0
        %v489 = vadd.f32 0.0, %v488
        %490 = vmatmul.f32.gmra.mxu0 %v427
        %v491 = vpop.f32.mrf.mxu0
        %v492 = vadd.f32 0.0, %v491
        %493 = vmatmul.f32.gmra.mxu0 %v430
        %v494 = vpop.f32.mrf.mxu0
        %v495 = vadd.f32 0.0, %v494
        %496 = vmatmul.f32.gmra.mxu0 %v433
        %v497 = vpop.f32.mrf.mxu0
        %v498 = vadd.f32 0.0, %v497
        %499 = vmatmul.f32.gmra.mxu0 %v436
        %v500 = vpop.f32.mrf.mxu0
        %v501 = vadd.f32 0.0, %v500
        %502 = vmatmul.f32.gmra.mxu0 %v439
        %v503 = vpop.f32.mrf.mxu0
        %v504 = vadd.f32 0.0, %v503
        %505 = vdwg.mxu0
        %v506 = vpack.c.bf16 %v462, %v459
        %v507 = vpack.c.bf16 %v468, %v465
        %v508 = vpack.c.bf16 %v474, %v471
        %v509 = vpack.c.bf16 %v480, %v477
        %v510 = vpack.c.bf16 %v486, %v483
        %v511 = vpack.c.bf16 %v492, %v489
        %v512 = vpack.c.bf16 %v498, %v495
        %v513 = vpack.c.bf16 %v504, %v501
        %v514 = vld [vmem:[%s3] sm:$0xff]
        %v515 = vld [vmem:[%s3 + $0x8] sm:$0xff]
        %v516 = vld [vmem:[%s3 + $0x10] sm:$0xf]
        %v517 = vld [vmem:[%s3 + $0x14] sm:$0xff]
        %v518 = vld [vmem:[%s3 + $0x1c] sm:$0xff]
        %v519 = vld [vmem:[%s3 + $0x24] sm:$0xf]
        %v520 = vld [vmem:[%s3 + $0x28] sm:$0xff]
        %v521 = vld [vmem:[%s3 + $0x30] sm:$0xff]
        %v522 = vld [vmem:[%s3 + $0x38] sm:$0xf]
        %v523 = vld [vmem:[%s3 + $0x3c] sm:$0xff]
        %v524 = vld [vmem:[%s3 + $0x44] sm:$0xff]
        %v525 = vld [vmem:[%s3 + $0x4c] sm:$0xf]
        %v538 = vunpack.c.l.b16 %v514
        %v539 = vunpack.c.h.b16 %v514
        %v540 = vunpack.c.l.b16 %v515
        %v541 = vunpack.c.h.b16 %v515
        %v542 = vunpack.c.l.b16 %v516
        %v543 = vunpack.c.l.b16 %v517
        %v544 = vunpack.c.h.b16 %v517
        %v545 = vunpack.c.l.b16 %v518
        %v546 = vunpack.c.h.b16 %v518
        %v547 = vunpack.c.l.b16 %v519
        %v548 = vunpack.c.l.b16 %v520
        %v549 = vunpack.c.h.b16 %v520
        %v550 = vunpack.c.l.b16 %v521
        %v551 = vunpack.c.h.b16 %v521
        %v552 = vunpack.c.l.b16 %v522
        %v553 = vunpack.c.l.b16 %v523
        %v554 = vunpack.c.h.b16 %v523
        %v555 = vunpack.c.l.b16 %v524
        %v556 = vunpack.c.h.b16 %v524
        %v557 = vunpack.c.l.b16 %v525
        %v558 = vpack.c.b16 %v543, %v538
        %v559 = vpack.c.b16 %v544, %v539
        %v560 = vpack.c.b16 %v545, %v540
        %v561 = vpack.c.b16 %v546, %v541
        %v562 = vpack.c.b16 %v547, %v542
        %v563 = vpack.c.b16 %v553, %v548
        %v564 = vpack.c.b16 %v554, %v549
        %v565 = vpack.c.b16 %v555, %v550
        %v566 = vpack.c.b16 %v556, %v551
        %v567 = vpack.c.b16 %v557, %v552
        %vm578 = vcmask 261120
        %v580 = vsel %vm578, %v506, 0
        %v583 = vsel %vm578, %v507, 0
        %v586 = vsel %vm578, %v508, 0
        %v589 = vsel %vm578, %v509, 0
        %v592 = vsel %vm578, %v510, 0
        %v595 = vsel %vm578, %v511, 0
        %v598 = vsel %vm578, %v512, 0
        %v601 = vsel %vm578, %v513, 0
        %603 = vmatpush.bf16.msra.mxu0 0
        %604 = vmatpush.bf16.msra.mxu0 0
        %605 = vmatpush.bf16.msra.mxu0 0
        %606 = vmatpush.bf16.msra.mxu0 0
        %607 = vmatpush.bf16.msra.mxu0 0
        %608 = vmatpush.bf16.msra.mxu0 0
        %609 = vmatpush.bf16.msra.mxu0 %v563
        %610 = vmatpush.bf16.msra.mxu0 %v558
        %611 = vmatmul.bf16.gmra.mxu0 %v580
        %v612 = vpop.f32.mrf.mxu0
        %v613 = vadd.f32 0.0, %v612
        %v614 = vpop.f32.mrf.mxu0
        %v615 = vadd.f32 0.0, %v614
        %616 = vmatmul.bf16.gmra.mxu0 %v583
        %v617 = vpop.f32.mrf.mxu0
        %v618 = vadd.f32 0.0, %v617
        %v619 = vpop.f32.mrf.mxu0
        %v620 = vadd.f32 0.0, %v619
        %621 = vmatmul.bf16.gmra.mxu0 %v586
        %v622 = vpop.f32.mrf.mxu0
        %v623 = vadd.f32 0.0, %v622
        %v624 = vpop.f32.mrf.mxu0
        %v625 = vadd.f32 0.0, %v624
        %626 = vmatmul.bf16.gmra.mxu0 %v589
        %v627 = vpop.f32.mrf.mxu0
        %v628 = vadd.f32 0.0, %v627
        %v629 = vpop.f32.mrf.mxu0
        %v630 = vadd.f32 0.0, %v629
        %631 = vmatmul.bf16.gmra.mxu0 %v592
        %v632 = vpop.f32.mrf.mxu0
        %v633 = vadd.f32 0.0, %v632
        %v634 = vpop.f32.mrf.mxu0
        %v635 = vadd.f32 0.0, %v634
        %636 = vmatmul.bf16.gmra.mxu0 %v595
        %v637 = vpop.f32.mrf.mxu0
        %v638 = vadd.f32 0.0, %v637
        %v639 = vpop.f32.mrf.mxu0
        %v640 = vadd.f32 0.0, %v639
        %641 = vmatmul.bf16.gmra.mxu0 %v598
        %v642 = vpop.f32.mrf.mxu0
        %v643 = vadd.f32 0.0, %v642
        %v644 = vpop.f32.mrf.mxu0
        %v645 = vadd.f32 0.0, %v644
        %646 = vmatmul.bf16.gmra.mxu0 %v601
        %v647 = vpop.f32.mrf.mxu0
        %v648 = vadd.f32 0.0, %v647
        %v649 = vpop.f32.mrf.mxu0
        %v650 = vadd.f32 0.0, %v649
        %651 = vdwg.mxu0
        %652 = vmatpush.bf16.msra.mxu0 0
        %653 = vmatpush.bf16.msra.mxu0 0
        %654 = vmatpush.bf16.msra.mxu0 0
        %655 = vmatpush.bf16.msra.mxu0 0
        %656 = vmatpush.bf16.msra.mxu0 0
        %657 = vmatpush.bf16.msra.mxu0 0
        %658 = vmatpush.bf16.msra.mxu0 %v564
        %659 = vmatpush.bf16.msra.mxu0 %v559
        %660 = vmatmul.bf16.gmra.mxu0 %v580
        %v661 = vpop.f32.mrf.mxu0
        %v662 = vadd.f32 0.0, %v661
        %v663 = vpop.f32.mrf.mxu0
        %v664 = vadd.f32 0.0, %v663
        %665 = vmatmul.bf16.gmra.mxu0 %v583
        %v666 = vpop.f32.mrf.mxu0
        %v667 = vadd.f32 0.0, %v666
        %v668 = vpop.f32.mrf.mxu0
        %v669 = vadd.f32 0.0, %v668
        %670 = vmatmul.bf16.gmra.mxu0 %v586
        %v671 = vpop.f32.mrf.mxu0
        %v672 = vadd.f32 0.0, %v671
        %v673 = vpop.f32.mrf.mxu0
        %v674 = vadd.f32 0.0, %v673
        %675 = vmatmul.bf16.gmra.mxu0 %v589
        %v676 = vpop.f32.mrf.mxu0
        %v677 = vadd.f32 0.0, %v676
        %v678 = vpop.f32.mrf.mxu0
        %v679 = vadd.f32 0.0, %v678
        %680 = vmatmul.bf16.gmra.mxu0 %v592
        %v681 = vpop.f32.mrf.mxu0
        %v682 = vadd.f32 0.0, %v681
        %v683 = vpop.f32.mrf.mxu0
        %v684 = vadd.f32 0.0, %v683
        %685 = vmatmul.bf16.gmra.mxu0 %v595
        %v686 = vpop.f32.mrf.mxu0
        %v687 = vadd.f32 0.0, %v686
        %v688 = vpop.f32.mrf.mxu0
        %v689 = vadd.f32 0.0, %v688
        %690 = vmatmul.bf16.gmra.mxu0 %v598
        %v691 = vpop.f32.mrf.mxu0
        %v692 = vadd.f32 0.0, %v691
        %v693 = vpop.f32.mrf.mxu0
        %v694 = vadd.f32 0.0, %v693
        %695 = vmatmul.bf16.gmra.mxu0 %v601
        %v696 = vpop.f32.mrf.mxu0
        %v697 = vadd.f32 0.0, %v696
        %v698 = vpop.f32.mrf.mxu0
        %v699 = vadd.f32 0.0, %v698
        %700 = vdwg.mxu0
        %701 = vmatpush.bf16.msra.mxu0 0
        %702 = vmatpush.bf16.msra.mxu0 0
        %703 = vmatpush.bf16.msra.mxu0 0
        %704 = vmatpush.bf16.msra.mxu0 0
        %705 = vmatpush.bf16.msra.mxu0 0
        %706 = vmatpush.bf16.msra.mxu0 0
        %707 = vmatpush.bf16.msra.mxu0 %v565
        %708 = vmatpush.bf16.msra.mxu0 %v560
        %709 = vmatmul.bf16.gmra.mxu0 %v580
        %v710 = vpop.f32.mrf.mxu0
        %v711 = vadd.f32 0.0, %v710
        %v712 = vpop.f32.mrf.mxu0
        %v713 = vadd.f32 0.0, %v712
        %714 = vmatmul.bf16.gmra.mxu0 %v583
        %v715 = vpop.f32.mrf.mxu0
        %v716 = vadd.f32 0.0, %v715
        %v717 = vpop.f32.mrf.mxu0
        %v718 = vadd.f32 0.0, %v717
        %719 = vmatmul.bf16.gmra.mxu0 %v586
        %v720 = vpop.f32.mrf.mxu0
        %v721 = vadd.f32 0.0, %v720
        %v722 = vpop.f32.mrf.mxu0
        %v723 = vadd.f32 0.0, %v722
        %724 = vmatmul.bf16.gmra.mxu0 %v589
        %v725 = vpop.f32.mrf.mxu0
        %v726 = vadd.f32 0.0, %v725
        %v727 = vpop.f32.mrf.mxu0
        %v728 = vadd.f32 0.0, %v727
        %729 = vmatmul.bf16.gmra.mxu0 %v592
        %v730 = vpop.f32.mrf.mxu0
        %v731 = vadd.f32 0.0, %v730
        %v732 = vpop.f32.mrf.mxu0
        %v733 = vadd.f32 0.0, %v732
        %734 = vmatmul.bf16.gmra.mxu0 %v595
        %v735 = vpop.f32.mrf.mxu0
        %v736 = vadd.f32 0.0, %v735
        %v737 = vpop.f32.mrf.mxu0
        %v738 = vadd.f32 0.0, %v737
        %739 = vmatmul.bf16.gmra.mxu0 %v598
        %v740 = vpop.f32.mrf.mxu0
        %v741 = vadd.f32 0.0, %v740
        %v742 = vpop.f32.mrf.mxu0
        %v743 = vadd.f32 0.0, %v742
        %744 = vmatmul.bf16.gmra.mxu0 %v601
        %v745 = vpop.f32.mrf.mxu0
        %v746 = vadd.f32 0.0, %v745
        %v747 = vpop.f32.mrf.mxu0
        %v748 = vadd.f32 0.0, %v747
        %749 = vdwg.mxu0
        %750 = vmatpush.bf16.msra.mxu0 0
        %751 = vmatpush.bf16.msra.mxu0 0
        %752 = vmatpush.bf16.msra.mxu0 0
        %753 = vmatpush.bf16.msra.mxu0 0
        %754 = vmatpush.bf16.msra.mxu0 0
        %755 = vmatpush.bf16.msra.mxu0 0
        %756 = vmatpush.bf16.msra.mxu0 %v566
        %757 = vmatpush.bf16.msra.mxu0 %v561
        %758 = vmatmul.bf16.gmra.mxu0 %v580
        %v759 = vpop.f32.mrf.mxu0
        %v760 = vadd.f32 0.0, %v759
        %v761 = vpop.f32.mrf.mxu0
        %v762 = vadd.f32 0.0, %v761
        %763 = vmatmul.bf16.gmra.mxu0 %v583
        %v764 = vpop.f32.mrf.mxu0
        %v765 = vadd.f32 0.0, %v764
        %v766 = vpop.f32.mrf.mxu0
        %v767 = vadd.f32 0.0, %v766
        %768 = vmatmul.bf16.gmra.mxu0 %v586
        %v769 = vpop.f32.mrf.mxu0
        %v770 = vadd.f32 0.0, %v769
        %v771 = vpop.f32.mrf.mxu0
        %v772 = vadd.f32 0.0, %v771
        %773 = vmatmul.bf16.gmra.mxu0 %v589
        %v774 = vpop.f32.mrf.mxu0
        %v775 = vadd.f32 0.0, %v774
        %v776 = vpop.f32.mrf.mxu0
        %v777 = vadd.f32 0.0, %v776
        %778 = vmatmul.bf16.gmra.mxu0 %v592
        %v779 = vpop.f32.mrf.mxu0
        %v780 = vadd.f32 0.0, %v779
        %v781 = vpop.f32.mrf.mxu0
        %v782 = vadd.f32 0.0, %v781
        %783 = vmatmul.bf16.gmra.mxu0 %v595
        %v784 = vpop.f32.mrf.mxu0
        %v785 = vadd.f32 0.0, %v784
        %v786 = vpop.f32.mrf.mxu0
        %v787 = vadd.f32 0.0, %v786
        %788 = vmatmul.bf16.gmra.mxu0 %v598
        %v789 = vpop.f32.mrf.mxu0
        %v790 = vadd.f32 0.0, %v789
        %v791 = vpop.f32.mrf.mxu0
        %v792 = vadd.f32 0.0, %v791
        %793 = vmatmul.bf16.gmra.mxu0 %v601
        %v794 = vpop.f32.mrf.mxu0
        %v795 = vadd.f32 0.0, %v794
        %v796 = vpop.f32.mrf.mxu0
        %v797 = vadd.f32 0.0, %v796
        %798 = vdwg.mxu0
        %799 = vmatpush.bf16.msra.mxu0 0
        %800 = vmatpush.bf16.msra.mxu0 0
        %801 = vmatpush.bf16.msra.mxu0 0
        %802 = vmatpush.bf16.msra.mxu0 0
        %803 = vmatpush.bf16.msra.mxu0 0
        %804 = vmatpush.bf16.msra.mxu0 0
        %805 = vmatpush.bf16.msra.mxu0 %v567
        %806 = vmatpush.bf16.msra.mxu0 %v562
        %807 = vmatmul.bf16.gmra.mxu0 %v580
        %v808 = vpop.f32.mrf.mxu0
        %v809 = vadd.f32 0.0, %v808
        %v810 = vpop.f32.mrf.mxu0
        %v811 = vadd.f32 0.0, %v810
        %812 = vmatmul.bf16.gmra.mxu0 %v583
        %v813 = vpop.f32.mrf.mxu0
        %v814 = vadd.f32 0.0, %v813
        %v815 = vpop.f32.mrf.mxu0
        %v816 = vadd.f32 0.0, %v815
        %817 = vmatmul.bf16.gmra.mxu0 %v586
        %v818 = vpop.f32.mrf.mxu0
        %v819 = vadd.f32 0.0, %v818
        %v820 = vpop.f32.mrf.mxu0
        %v821 = vadd.f32 0.0, %v820
        %822 = vmatmul.bf16.gmra.mxu0 %v589
        %v823 = vpop.f32.mrf.mxu0
        %v824 = vadd.f32 0.0, %v823
        %v825 = vpop.f32.mrf.mxu0
        %v826 = vadd.f32 0.0, %v825
        %827 = vmatmul.bf16.gmra.mxu0 %v592
        %v828 = vpop.f32.mrf.mxu0
        %v829 = vadd.f32 0.0, %v828
        %v830 = vpop.f32.mrf.mxu0
        %v831 = vadd.f32 0.0, %v830
        %832 = vmatmul.bf16.gmra.mxu0 %v595
        %v833 = vpop.f32.mrf.mxu0
        %v834 = vadd.f32 0.0, %v833
        %v835 = vpop.f32.mrf.mxu0
        %v836 = vadd.f32 0.0, %v835
        %837 = vmatmul.bf16.gmra.mxu0 %v598
        %v838 = vpop.f32.mrf.mxu0
        %v839 = vadd.f32 0.0, %v838
        %v840 = vpop.f32.mrf.mxu0
        %v841 = vadd.f32 0.0, %v840
        %842 = vmatmul.bf16.gmra.mxu0 %v601
        %v843 = vpop.f32.mrf.mxu0
        %v844 = vadd.f32 0.0, %v843
        %v845 = vpop.f32.mrf.mxu0
        %v846 = vadd.f32 0.0, %v845
        %847 = vdwg.mxu0
        %v848 = vrot.slane %v662, 1
        %v849 = vrot.slane %v664, 1
        %v850 = vrot.slane %v667, 1
        %v851 = vrot.slane %v669, 1
        %v852 = vrot.slane %v672, 1
        %v853 = vrot.slane %v674, 1
        %v854 = vrot.slane %v677, 1
        %v855 = vrot.slane %v679, 1
        %v856 = vrot.slane %v682, 1
        %v857 = vrot.slane %v684, 1
        %v858 = vrot.slane %v687, 1
        %v859 = vrot.slane %v689, 1
        %v860 = vrot.slane %v692, 1
        %v861 = vrot.slane %v694, 1
        %v862 = vrot.slane %v697, 1
        %v863 = vrot.slane %v699, 1
        %v864 = vlaneseq
        %v865 = vshrl.u32 %v864, 7
        %vm866 = vcmp.lt.s32.totalorder %v865, 7
        %v867 = vsel %vm866, %v862, %v863
        %v868 = vsel %vm866, %v861, %v862
        %v869 = vsel %vm866, %v860, %v861
        %v870 = vsel %vm866, %v859, %v860
        %v871 = vsel %vm866, %v858, %v859
        %v872 = vsel %vm866, %v857, %v858
        %v873 = vsel %vm866, %v856, %v857
        %v874 = vsel %vm866, %v855, %v856
        %v875 = vsel %vm866, %v854, %v855
        %v876 = vsel %vm866, %v853, %v854
        %v877 = vsel %vm866, %v852, %v853
        %v878 = vsel %vm866, %v851, %v852
        %v879 = vsel %vm866, %v850, %v851
        %v880 = vsel %vm866, %v849, %v850
        %v881 = vsel %vm866, %v848, %v849
        %v882 = vsel %vm866, %v863, %v848
        %v883 = vadd.f32 %v613, %v881
        %v884 = vadd.f32 %v615, %v880
        %v885 = vadd.f32 %v618, %v879
        %v886 = vadd.f32 %v620, %v878
        %v887 = vadd.f32 %v623, %v877
        %v888 = vadd.f32 %v625, %v876
        %v889 = vadd.f32 %v628, %v875
        %v890 = vadd.f32 %v630, %v874
        %v891 = vadd.f32 %v633, %v873
        %v892 = vadd.f32 %v635, %v872
        %v893 = vadd.f32 %v638, %v871
        %v894 = vadd.f32 %v640, %v870
        %v895 = vadd.f32 %v643, %v869
        %v896 = vadd.f32 %v645, %v868
        %v897 = vadd.f32 %v648, %v867
        %v898 = vadd.f32 %v650, %v882
        %v899 = vrot.slane %v711, 2
        %v900 = vrot.slane %v713, 2
        %v901 = vrot.slane %v716, 2
        %v902 = vrot.slane %v718, 2
        %v903 = vrot.slane %v721, 2
        %v904 = vrot.slane %v723, 2
        %v905 = vrot.slane %v726, 2
        %v906 = vrot.slane %v728, 2
        %v907 = vrot.slane %v731, 2
        %v908 = vrot.slane %v733, 2
        %v909 = vrot.slane %v736, 2
        %v910 = vrot.slane %v738, 2
        %v911 = vrot.slane %v741, 2
        %v912 = vrot.slane %v743, 2
        %v913 = vrot.slane %v746, 2
        %v914 = vrot.slane %v748, 2
        %vm915 = vcmp.lt.s32.totalorder %v865, 6
        %v916 = vsel %vm915, %v913, %v914
        %v917 = vsel %vm915, %v912, %v913
        %v918 = vsel %vm915, %v911, %v912
        %v919 = vsel %vm915, %v910, %v911
        %v920 = vsel %vm915, %v909, %v910
        %v921 = vsel %vm915, %v908, %v909
        %v922 = vsel %vm915, %v907, %v908
        %v923 = vsel %vm915, %v906, %v907
        %v924 = vsel %vm915, %v905, %v906
        %v925 = vsel %vm915, %v904, %v905
        %v926 = vsel %vm915, %v903, %v904
        %v927 = vsel %vm915, %v902, %v903
        %v928 = vsel %vm915, %v901, %v902
        %v929 = vsel %vm915, %v900, %v901
        %v930 = vsel %vm915, %v899, %v900
        %v931 = vsel %vm915, %v914, %v899
        %v932 = vadd.f32 %v883, %v930
        %v933 = vadd.f32 %v884, %v929
        %v934 = vadd.f32 %v885, %v928
        %v935 = vadd.f32 %v886, %v927
        %v936 = vadd.f32 %v887, %v926
        %v937 = vadd.f32 %v888, %v925
        %v938 = vadd.f32 %v889, %v924
        %v939 = vadd.f32 %v890, %v923
        %v940 = vadd.f32 %v891, %v922
        %v941 = vadd.f32 %v892, %v921
        %v942 = vadd.f32 %v893, %v920
        %v943 = vadd.f32 %v894, %v919
        %v944 = vadd.f32 %v895, %v918
        %v945 = vadd.f32 %v896, %v917
        %v946 = vadd.f32 %v897, %v916
        %v947 = vadd.f32 %v898, %v931
        %v948 = vrot.slane %v760, 3
        %v949 = vrot.slane %v762, 3
        %v950 = vrot.slane %v765, 3
        %v951 = vrot.slane %v767, 3
        %v952 = vrot.slane %v770, 3
        %v953 = vrot.slane %v772, 3
        %v954 = vrot.slane %v775, 3
        %v955 = vrot.slane %v777, 3
        %v956 = vrot.slane %v780, 3
        %v957 = vrot.slane %v782, 3
        %v958 = vrot.slane %v785, 3
        %v959 = vrot.slane %v787, 3
        %v960 = vrot.slane %v790, 3
        %v961 = vrot.slane %v792, 3
        %v962 = vrot.slane %v795, 3
        %v963 = vrot.slane %v797, 3
        %vm964 = vcmp.lt.s32.totalorder %v865, 5
        %v965 = vsel %vm964, %v962, %v963
        %v966 = vsel %vm964, %v961, %v962
        %v967 = vsel %vm964, %v960, %v961
        %v968 = vsel %vm964, %v959, %v960
        %v969 = vsel %vm964, %v958, %v959
        %v970 = vsel %vm964, %v957, %v958
        %v971 = vsel %vm964, %v956, %v957
        %v972 = vsel %vm964, %v955, %v956
        %v973 = vsel %vm964, %v954, %v955
        %v974 = vsel %vm964, %v953, %v954
        %v975 = vsel %vm964, %v952, %v953
        %v976 = vsel %vm964, %v951, %v952
        %v977 = vsel %vm964, %v950, %v951
        %v978 = vsel %vm964, %v949, %v950
        %v979 = vsel %vm964, %v948, %v949
        %v980 = vsel %vm964, %v963, %v948
        %v981 = vadd.f32 %v932, %v979
        %v982 = vadd.f32 %v933, %v978
        %v983 = vadd.f32 %v934, %v977
        %v984 = vadd.f32 %v935, %v976
        %v985 = vadd.f32 %v936, %v975
        %v986 = vadd.f32 %v937, %v974
        %v987 = vadd.f32 %v938, %v973
        %v988 = vadd.f32 %v939, %v972
        %v989 = vadd.f32 %v940, %v971
        %v990 = vadd.f32 %v941, %v970
        %v991 = vadd.f32 %v942, %v969
        %v992 = vadd.f32 %v943, %v968
        %v993 = vadd.f32 %v944, %v967
        %v994 = vadd.f32 %v945, %v966
        %v995 = vadd.f32 %v946, %v965
        %v996 = vadd.f32 %v947, %v980
        %v997 = vrot.slane %v809, 4
        %v998 = vrot.slane %v811, 4
        %v999 = vrot.slane %v814, 4
        %v1000 = vrot.slane %v816, 4
        %v1001 = vrot.slane %v819, 4
        %v1002 = vrot.slane %v821, 4
        %v1003 = vrot.slane %v824, 4
        %v1004 = vrot.slane %v826, 4
        %v1005 = vrot.slane %v829, 4
        %v1006 = vrot.slane %v831, 4
        %v1007 = vrot.slane %v834, 4
        %v1008 = vrot.slane %v836, 4
        %v1009 = vrot.slane %v839, 4
        %v1010 = vrot.slane %v841, 4
        %v1011 = vrot.slane %v844, 4
        %v1012 = vrot.slane %v846, 4
        %vm1013 = vcmp.lt.s32.totalorder %v865, 4
        %v1014 = vsel %vm1013, %v1011, %v1012
        %v1015 = vsel %vm1013, %v1010, %v1011
        %v1016 = vsel %vm1013, %v1009, %v1010
        %v1017 = vsel %vm1013, %v1008, %v1009
        %v1018 = vsel %vm1013, %v1007, %v1008
        %v1019 = vsel %vm1013, %v1006, %v1007
        %v1020 = vsel %vm1013, %v1005, %v1006
        %v1021 = vsel %vm1013, %v1004, %v1005
        %v1022 = vsel %vm1013, %v1003, %v1004
        %v1023 = vsel %vm1013, %v1002, %v1003
        %v1024 = vsel %vm1013, %v1001, %v1002
        %v1025 = vsel %vm1013, %v1000, %v1001
        %v1026 = vsel %vm1013, %v999, %v1000
        %v1027 = vsel %vm1013, %v998, %v999
        %v1028 = vsel %vm1013, %v997, %v998
        %v1029 = vsel %vm1013, %v1012, %v997
        %v1030 = vadd.f32 %v981, %v1028
        %v1031 = vadd.f32 %v982, %v1027
        %v1032 = vadd.f32 %v983, %v1026
        %v1033 = vadd.f32 %v984, %v1025
        %v1034 = vadd.f32 %v985, %v1024
        %v1035 = vadd.f32 %v986, %v1023
        %v1036 = vadd.f32 %v987, %v1022
        %v1037 = vadd.f32 %v988, %v1021
        %v1038 = vadd.f32 %v989, %v1020
        %v1039 = vadd.f32 %v990, %v1019
        %v1040 = vadd.f32 %v991, %v1018
        %v1041 = vadd.f32 %v992, %v1017
        %v1042 = vadd.f32 %v993, %v1016
        %v1043 = vadd.f32 %v994, %v1015
        %v1044 = vadd.f32 %v995, %v1014
        %v1045 = vadd.f32 %v996, %v1029
        %v1046 = vld [vmem:[%s4] sm:$0x1]
        %v1047 = vperm.slane %v1046, 0
        %v1048 = vadd.f32 %v1030, %v1047
        %v1049 = vadd.f32 %v1031, %v1047
        %v1050 = vadd.f32 %v1032, %v1047
        %v1051 = vadd.f32 %v1033, %v1047
        %v1052 = vadd.f32 %v1034, %v1047
        %v1053 = vadd.f32 %v1035, %v1047
        %v1054 = vadd.f32 %v1036, %v1047
        %v1055 = vadd.f32 %v1037, %v1047
        %v1056 = vadd.f32 %v1038, %v1047
        %v1057 = vadd.f32 %v1039, %v1047
        %v1058 = vadd.f32 %v1040, %v1047
        %v1059 = vadd.f32 %v1041, %v1047
        %v1060 = vadd.f32 %v1042, %v1047
        %v1061 = vadd.f32 %v1043, %v1047
        %v1062 = vadd.f32 %v1044, %v1047
        %v1063 = vadd.f32 %v1045, %v1047
        %v1064 = vmax.f32 %v1048, 0.0
        %v1065 = vmax.f32 %v1049, 0.0
        %v1066 = vmax.f32 %v1050, 0.0
        %v1067 = vmax.f32 %v1051, 0.0
        %v1068 = vmax.f32 %v1052, 0.0
        %v1069 = vmax.f32 %v1053, 0.0
        %v1070 = vmax.f32 %v1054, 0.0
        %v1071 = vmax.f32 %v1055, 0.0
        %v1072 = vmax.f32 %v1056, 0.0
        %v1073 = vmax.f32 %v1057, 0.0
        %v1074 = vmax.f32 %v1058, 0.0
        %v1075 = vmax.f32 %v1059, 0.0
        %v1076 = vmax.f32 %v1060, 0.0
        %v1077 = vmax.f32 %v1061, 0.0
        %v1078 = vmax.f32 %v1062, 0.0
        %v1079 = vmax.f32 %v1063, 0.0
        %v1080 = vadd.s32 %v865, 8
        %vm1081 = vcmp.lt.s32.totalorder %v287, 16
        %vm1082 = vcmp.lt.s32.totalorder %v287, 32
        %v1083 = vsel %vm1082, 13, 12
        %v1084 = vsel %vm1081, 14, %v1083
        %vm1085 = vcmp.lt.s32.totalorder %v865, %v1084
        %vm1086 = vcmp.lt.s32.totalorder %v1080, %v1084
        %v1087 = vsel %vm1085, %v1064, 0.0
        %v1088 = vsel %vm1086, %v1065, 0.0
        %v1089 = vsel %vm1085, %v1066, 0.0
        %v1090 = vsel %vm1086, %v1067, 0.0
        %v1091 = vsel %vm1085, %v1068, 0.0
        %v1092 = vsel %vm1086, %v1069, 0.0
        %v1093 = vsel %vm1085, %v1070, 0.0
        %v1094 = vsel %vm1086, %v1071, 0.0
        %v1095 = vsel %vm1085, %v1072, 0.0
        %v1096 = vsel %vm1086, %v1073, 0.0
        %v1097 = vsel %vm1085, %v1074, 0.0
        %v1098 = vsel %vm1086, %v1075, 0.0
        %v1099 = vsel %vm1085, %v1076, 0.0
        %v1100 = vsel %vm1086, %v1077, 0.0
        %v1101 = vsel %vm1085, %v1078, 0.0
        %v1102 = vsel %vm1086, %v1079, 0.0
        %v1103 = vmax.f32 %v1087, %v1088
        %v1104 = vrot.slane %v1103, 4
        %v1105 = vmax.f32 %v1103, %v1104
        %v1106 = vrot.slane %v1105, 2
        %v1107 = vmax.f32 %v1105, %v1106
        %v1108 = vrot.slane %v1107, 1
        %v1109 = vmax.f32 %v1107, %v1108
        %v1110 = vmax.f32 %v1089, %v1090
        %v1111 = vrot.slane %v1110, 4
        %v1112 = vmax.f32 %v1110, %v1111
        %v1113 = vrot.slane %v1112, 2
        %v1114 = vmax.f32 %v1112, %v1113
        %v1115 = vrot.slane %v1114, 1
        %v1116 = vmax.f32 %v1114, %v1115
        %v1117 = vmax.f32 %v1091, %v1092
        %v1118 = vrot.slane %v1117, 4
        %v1119 = vmax.f32 %v1117, %v1118
        %v1120 = vrot.slane %v1119, 2
        %v1121 = vmax.f32 %v1119, %v1120
        %v1122 = vrot.slane %v1121, 1
        %v1123 = vmax.f32 %v1121, %v1122
        %v1124 = vmax.f32 %v1093, %v1094
        %v1125 = vrot.slane %v1124, 4
        %v1126 = vmax.f32 %v1124, %v1125
        %v1127 = vrot.slane %v1126, 2
        %v1128 = vmax.f32 %v1126, %v1127
        %v1129 = vrot.slane %v1128, 1
        %v1130 = vmax.f32 %v1128, %v1129
        %v1131 = vmax.f32 %v1095, %v1096
        %v1132 = vrot.slane %v1131, 4
        %v1133 = vmax.f32 %v1131, %v1132
        %v1134 = vrot.slane %v1133, 2
        %v1135 = vmax.f32 %v1133, %v1134
        %v1136 = vrot.slane %v1135, 1
        %v1137 = vmax.f32 %v1135, %v1136
        %v1138 = vmax.f32 %v1097, %v1098
        %v1139 = vrot.slane %v1138, 4
        %v1140 = vmax.f32 %v1138, %v1139
        %v1141 = vrot.slane %v1140, 2
        %v1142 = vmax.f32 %v1140, %v1141
        %v1143 = vrot.slane %v1142, 1
        %v1144 = vmax.f32 %v1142, %v1143
        %v1145 = vmax.f32 %v1099, %v1100
        %v1146 = vrot.slane %v1145, 4
        %v1147 = vmax.f32 %v1145, %v1146
        %v1148 = vrot.slane %v1147, 2
        %v1149 = vmax.f32 %v1147, %v1148
        %v1150 = vrot.slane %v1149, 1
        %v1151 = vmax.f32 %v1149, %v1150
        %v1152 = vmax.f32 %v1101, %v1102
        %v1153 = vrot.slane %v1152, 4
        %v1154 = vmax.f32 %v1152, %v1153
        %v1155 = vrot.slane %v1154, 2
        %v1156 = vmax.f32 %v1154, %v1155
        %v1157 = vrot.slane %v1156, 1
        %v1158 = vmax.f32 %v1156, %v1157
        %v1159 = vpack.c.bf16 %v1109, %v1109
        %v1160 = vpack.c.bf16 %v1116, %v1116
        %v1161 = vpack.c.bf16 %v1123, %v1123
        %v1162 = vpack.c.bf16 %v1130, %v1130
        %v1163 = vpack.c.bf16 %v1137, %v1137
        %v1164 = vpack.c.bf16 %v1144, %v1144
        %v1165 = vpack.c.bf16 %v1151, %v1151
        %v1166 = vpack.c.bf16 %v1158, %v1158
        %v1167 = vld [vmem:[%s5] sm:$0xf]
        %v1168 = vld [vmem:[%s5 + $0x4] sm:$0xf]
        %v1169 = vld [vmem:[%s5 + $0x8] sm:$0xf]
        %v1170 = vld [vmem:[%s5 + $0xc] sm:$0xf]
        %v1171 = vld [vmem:[%s5 + $0x10] sm:$0xf]
        %v1172 = vld [vmem:[%s5 + $0x14] sm:$0xf]
        %v1173 = vld [vmem:[%s5 + $0x18] sm:$0xf]
        %v1174 = vld [vmem:[%s5 + $0x1c] sm:$0xf]
        %v1175 = vld [vmem:[%s5 + $0x20] sm:$0xf]
        %v1176 = vld [vmem:[%s5 + $0x24] sm:$0xf]
        %v1177 = vld [vmem:[%s5 + $0x28] sm:$0xf]
        %v1178 = vld [vmem:[%s5 + $0x2c] sm:$0xf]
        %v1179 = vld [vmem:[%s5 + $0x30] sm:$0xf]
        %v1180 = vld [vmem:[%s5 + $0x34] sm:$0xf]
        %v1181 = vld [vmem:[%s5 + $0x38] sm:$0xf]
        %v1182 = vld [vmem:[%s5 + $0x3c] sm:$0xf]
        %v1183 = vld [vmem:[%s4 + $0x1] sm:$0x1]
        %v1184 = vperm.slane %v1183, 0
        %v1193 = vunpack.c.l.b16 %v1159
        %v1194 = vunpack.c.l.b16 %v1160
        %v1195 = vunpack.c.l.b16 %v1161
        %v1196 = vunpack.c.l.b16 %v1162
        %v1197 = vunpack.c.l.b16 %v1163
        %v1198 = vunpack.c.l.b16 %v1164
        %v1199 = vunpack.c.l.b16 %v1165
        %v1200 = vunpack.c.l.b16 %v1166
        %vm1201 = vcmask 1041409
        %v1202 = vsel %vm1201, %v1194, %v1193
        %vm1203 = vcmask 1042434
        %v1204 = vsel %vm1203, %v1195, %v1202
        %vm1205 = vcmask 1043459
        %v1206 = vsel %vm1205, %v1196, %v1204
        %vm1207 = vcmask 1044484
        %v1208 = vsel %vm1207, %v1197, %v1206
        %vm1209 = vcmask 1045509
        %v1210 = vsel %vm1209, %v1198, %v1208
        %vm1211 = vcmask 1046534
        %v1212 = vsel %vm1211, %v1199, %v1210
        %vm1213 = vcmask 1047559
        %v1214 = vsel %vm1213, %v1200, %v1212
        %v1215 = vpack.c.b16 %v1214, %v1214
        %v1233 = vunpack.c.l.b16 %v1167
        %v1234 = vunpack.c.l.b16 %v1168
        %v1235 = vunpack.c.l.b16 %v1169
        %v1236 = vunpack.c.l.b16 %v1170
        %v1237 = vunpack.c.l.b16 %v1171
        %v1238 = vunpack.c.l.b16 %v1172
        %v1239 = vunpack.c.l.b16 %v1173
        %v1240 = vunpack.c.l.b16 %v1174
        %v1241 = vunpack.c.l.b16 %v1175
        %v1242 = vunpack.c.l.b16 %v1176
        %v1243 = vunpack.c.l.b16 %v1177
        %v1244 = vunpack.c.l.b16 %v1178
        %v1245 = vunpack.c.l.b16 %v1179
        %v1246 = vunpack.c.l.b16 %v1180
        %v1247 = vunpack.c.l.b16 %v1181
        %v1248 = vunpack.c.l.b16 %v1182
        %v1249 = vpack.c.b16 %v1234, %v1233
        %v1250 = vpack.c.b16 %v1236, %v1235
        %v1251 = vpack.c.b16 %v1238, %v1237
        %v1252 = vpack.c.b16 %v1240, %v1239
        %v1253 = vpack.c.b16 %v1242, %v1241
        %v1254 = vpack.c.b16 %v1244, %v1243
        %v1255 = vpack.c.b16 %v1246, %v1245
        %v1256 = vpack.c.b16 %v1248, %v1247
        %1265 = vmatpush.bf16.msra.mxu0 %v1256
        %1266 = vmatpush.bf16.msra.mxu0 %v1255
        %1267 = vmatpush.bf16.msra.mxu0 %v1254
        %1268 = vmatpush.bf16.msra.mxu0 %v1253
        %1269 = vmatpush.bf16.msra.mxu0 %v1252
        %1270 = vmatpush.bf16.msra.mxu0 %v1251
        %1271 = vmatpush.bf16.msra.mxu0 %v1250
        %1272 = vmatpush.bf16.msra.mxu0 %v1249
        %1273 = vmatmul.bf16.gmra.mxu0 %v1215
        %v1274 = vpop.f32.mrf.mxu0
        %v1275 = vadd.f32 %v1184, %v1274
        %v1276 = vpop.f32.mrf.mxu0
        %1277 = vdwg.mxu0
        %v1278 = vmax.f32 %v1275, 0.0
        %v1279 = vld [vmem:[%s268] sm:$0xff]
        %1281 = vset.pattern.permute.xlu0 0
        %1282 = vperm.xlu0 %1281, %v1279
        %v1283 = vpop.permute.xlu0 %1282
        %v1285 = vmul.f32 %v1278, %v1283
        %1286 = vst [vmem:[%s258] sm:$0xff] %v1285
        %s1287 = sand.u32 %s164, 1
        %s1288 = scalar_lea.sflag [#allocation3], %s1287
        %s1289 = sand.u32 %s164, 1
        %s1290 = smul.addr %s1289, 8
        %s1291 = scalar_lea.vmem [#allocation2], %s1290
        // Predicated region
        $region45: #{tpu_custom_call.1} parent=43 // pred_check
          %p1292 = pneg %p174
        $region46: #{tpu_custom_call.1} parent=43 // pred_check_branch
          %1294 = sbr.rel (%p1292) target = $region48
        $region47: #{tpu_custom_call.1} parent=43 // pred_region
          %1296 = vsyncadd %s1288, 0
          %s1297 = smul.addr %s20, 8
          %s1298 = scalar_lea.hbm %s6, %s1297
          %s1300 = sshll.u32 %s1291, 4
          %s1301 = int_to_ptr.vmem [resolvable:$true] %s1300
          %s1302 = sshll.u32 %s1298, 4
          %s1303 = int_to_ptr.hbm [resolvable:$true] %s1302
          %1305 = dma.vmem_to_hbm [thread:$0]  %s1301, 128, %s1303, %s1288
        $region48: #{tpu_custom_call.1} parent=43 // pred_fallthru
          _
      $region44: #{tpu_custom_call.1} parent=5 // pred_fallthru
        _
      %p1306 = scmp.le.s32.totalorder 2, %s15
      // Predicated region
      $region49: #{tpu_custom_call.1} parent=5 // pred_check
        %p1307 = pneg %p1306
      $region50: #{tpu_custom_call.1} parent=5 // pred_check_branch
        %1309 = sbr.rel (%p1307) target = $region52
      $region51: #{tpu_custom_call.1} parent=5 // pred_region
        %s1310 = ssub.s32 %s15, 2
        // Predicated region
        $region53: #{tpu_custom_call.1} parent=51 // pred_check
          %p1311 = pneg %p180
        $region54: #{tpu_custom_call.1} parent=51 // pred_check_branch
          %1313 = sbr.rel (%p1311) target = $region56
        $region55: #{tpu_custom_call.1} parent=51 // pred_region
          %s1314 = sand.u32 %s165, 1
          %s1315 = scalar_lea.sflag [#allocation3], %s1314
          %s1316 = sand.u32 %s165, 1
          %s1317 = smul.addr %s1316, 8
          %s1318 = scalar_lea.vmem [#allocation2], %s1317
          %1320 = dma.done %s1315, 128
        $region56: #{tpu_custom_call.1} parent=51 // pred_fallthru
          _
      $region52: #{tpu_custom_call.1} parent=5 // pred_fallthru
        _
    $region6: #{tpu_custom_call.1} parent=1 // loop_footer
      %s19 = sadd.s32 1, %s15
    $region7: #{tpu_custom_call.1} parent=1 // loop_footer_branch
      %14 = sbr.rel target = $region3
    $region8: #{tpu_custom_call.1} parent=1 // loop_exit
      _
    %1321 = vsyncpa [#allocation3], 1
    %s1322 = scalar_lea.sflag [#allocation3], 1
    %1323 = vsyncpa %s1322, 1

</llo_original>
